<compile_context>
chip_gen: v5e
topology: v5e:2x2
jax: 0.10.0
libtpu: 0.0.40
codegen_flags: <defaults>
</compile_context>

<pallas_src>
from functools import partial

import jax
import jax.numpy as jnp
from jax.experimental import pallas as pl
from jax.experimental.pallas import tpu as pltpu

NUM_LAYERS = 3
LANE = 128
SUBLANE = 8


def _round_up(x, m):
    return ((x + m - 1) // m) * m


def _pick_vmem_limit():
    """~75% of physical VMEM (48 MiB on v7x, 96 MiB on v5e/v6e), conservative fallback."""
    try:
        cap = int(pltpu.get_tpu_info().vmem_capacity_bytes)
        return max(32 << 20, min(int(cap * 0.75), 112 << 20))
    except Exception:
        pass
    try:
        kind = jax.devices()[0].device_kind.lower()
    except Exception:
        kind = ""
    if "v7" in kind:
        return 48 << 20
    if "v6" in kind or "v5" in kind:
        return 96 << 20
    return 32 << 20


def _a_buffer_count():
    """v5e's lower HBM BW benefits from a deeper prefetch of the streamed A tiles."""
    try:
        kind = jax.devices()[0].device_kind.lower()
    except Exception:
        kind = ""
    return 3 if "v5" in kind else 2


def _spec(shape, index_map, mode=None):
    if mode is None:
        return pl.BlockSpec(shape, index_map)
    return pl.BlockSpec(shape, index_map, pipeline_mode=mode)


# ---------------------------------------------------------------------------
# Kernels
# ---------------------------------------------------------------------------
def sage_layer_kernel(a_ref, inv_ref, h_ref, w_ref, b_ref, out_ref, acc_ref, *,
                      tm, tk, d_in, apply_relu):
    """Fused GraphSAGE layer: out = act([ (A@h)*invdeg | h_root ] @ [W_l;W_r] + b).

    grid = (row tiles i [parallel], K tiles k [arbitrary, last]).
      a_ref   : (tm, tk)   bf16  streamed 0/1 adjacency tile
      inv_ref : (tm, 1)    f32   per-destination-row 1/deg
      h_ref   : (N_pad, d_in)    node features, fully VMEM-resident (single-buffered)
      w_ref   : (2*d_in, d_out)  fused [W_l ; W_r]
      b_ref   : (1, d_out)
      acc_ref : (tm, 2*d_in) f32 scratch; [:, :d_in] aggregation accumulator,
                                 [:, d_in:] root features (written once at k==0)
    """
    i = pl.program_id(0)
    k = pl.program_id(1)

    @pl.when(k == 0)
    def _():
        acc_ref[:, :d_in] = jnp.zeros((tm, d_in), jnp.float32)
        acc_ref[:, d_in:] = h_ref[pl.ds(pl.multiple_of(i * tm, tm), tm), :]

    # partial aggregation: A[i, k] @ h[k*tk : (k+1)*tk, :]   (f32 accumulate)
    hk = h_ref[pl.ds(pl.multiple_of(k * tk, tk), tk), :]
    acc_ref[:, :d_in] += jnp.dot(a_ref[...].astype(jnp.float32), hk,
                                 preferred_element_type=jnp.float32)

    @pl.when(k == pl.num_programs(1) - 1)
    def _():
        # mean aggregation = (sum over neighbours) * 1/deg, applied post-accumulation
        acc_ref[:, :d_in] = acc_ref[:, :d_in] * inv_ref[...]
        # fused SAGE linears: one MXU pass with K = 2*d_in, no concat temp
        y = jnp.dot(acc_ref[...], w_ref[...],
                    preferred_element_type=jnp.float32) + b_ref[...]
        if apply_relu:
            y = jnp.maximum(y, 0.0)
        out_ref[...] = y.astype(out_ref.dtype)


def mean_pool_kernel(p_ref, h_ref, out_ref, acc_ref, *, final_relu):
    """global_mean_pool as P @ h, K-tiled over nodes.  grid = (K tiles,) ['arbitrary']."""
    k = pl.program_id(0)

    @pl.when(k == 0)
    def _():
        acc_ref[...] = jnp.zeros_like(acc_ref)

    acc_ref[...] += jnp.dot(p_ref[...], h_ref[...],
                            preferred_element_type=jnp.float32)

    @pl.when(k == pl.num_programs(0) - 1)
    def _():
        y = acc_ref[...]
        if final_relu:
            y = jnp.maximum(y, 0.0)
        out_ref[...] = y.astype(out_ref.dtype)


# ---------------------------------------------------------------------------
# pallas_call wrappers
# ---------------------------------------------------------------------------
def _sage_layer(A, invdeg, h, w_cat, b2d, *, tm, tk, apply_relu):
    N_pad, d_in = h.shape
    d_out = w_cat.shape[1]
    grid = (N_pad // tm, N_pad // tk)

    flops = (2 * N_pad * N_pad * d_in               # aggregation A @ h
             + 2 * N_pad * (2 * d_in) * d_out)      # fused linear
    bytes_accessed = (2 * N_pad * N_pad              # bf16 adjacency stream
                      + 4 * (N_pad * d_in + N_pad * d_out + N_pad
                             + int(w_cat.size) + int(b2d.size)))

    kernel = partial(sage_layer_kernel, tm=tm, tk=tk, d_in=d_in,
                     apply_relu=apply_relu)

    def call(tuned):
        single_buf = pl.Buffered(1) if tuned else None       # grid-invariant operands
        abufs = _a_buffer_count() if tuned else 2
        a_mode = pl.Buffered(abufs) if (tuned and abufs != 2) else None
        vmem = _pick_vmem_limit() if tuned else (32 << 20)
        return pl.pallas_call(
            kernel,
            grid=grid,
            in_specs=[
                _spec((tm, tk), lambda i, k: (i, k), a_mode),          # A streamed (bf16)
                _spec((tm, 1), lambda i, k: (i, 0)),                   # 1/deg per dst row
                _spec((N_pad, d_in), lambda i, k: (0, 0), single_buf),     # h resident
                _spec((2 * d_in, d_out), lambda i, k: (0, 0), single_buf), # fused weights
                _spec((1, d_out), lambda i, k: (0, 0), single_buf),        # bias
            ],
            out_specs=pl.BlockSpec((tm, d_out), lambda i, k: (i, 0)),
            # TODO(synk): on v7x, emitting intermediate h in bf16 doubles resident-N
            # headroom (f32 accumulation kept); f32 here for bit-exactness vs torch.
            out_shape=jax.ShapeDtypeStruct((N_pad, d_out), jnp.float32),
            scratch_shapes=[pltpu.VMEM((tm, 2 * d_in), jnp.float32)],
            compiler_params=pltpu.CompilerParams(
                dimension_semantics=("parallel", "arbitrary"),
                vmem_limit_bytes=vmem),
            cost_estimate=pl.CostEstimate(flops=flops, transcendentals=0,
                                          bytes_accessed=bytes_accessed),
        )(A, invdeg, h, w_cat, b2d)

    try:
        return call(True)
    except Exception:
        # Conservative fallback (default double-buffering, 32 MiB limit) if the tuned
        # pipeline config fails to lower on this jax/libtpu combination.
        return call(False)


def _mean_pool(P, h, *, tk, final_relu):
    G_pad, N_pad = P.shape
    D_pad = h.shape[1]
    grid = (N_pad // tk,)

    flops = 2 * G_pad * N_pad * D_pad
    bytes_accessed = 4 * (int(P.size) + int(h.size) + G_pad * D_pad)

    kernel = partial(mean_pool_kernel, final_relu=final_relu)
    return pl.pallas_call(
        kernel,
        grid=grid,
        in_specs=[
            pl.BlockSpec((G_pad, tk), lambda k: (0, k)),
            pl.BlockSpec((tk, D_pad), lambda k: (k, 0)),
        ],
        out_specs=pl.BlockSpec((G_pad, D_pad), lambda k: (0, 0)),
        out_shape=jax.ShapeDtypeStruct((G_pad, D_pad), jnp.float32),
        scratch_shapes=[pltpu.VMEM((G_pad, D_pad), jnp.float32)],
        compiler_params=pltpu.CompilerParams(
            dimension_semantics=("arbitrary",),
            vmem_limit_bytes=32 << 20),
        cost_estimate=pl.CostEstimate(flops=flops, transcendentals=0,
                                      bytes_accessed=bytes_accessed),
    )(P, h)


# ---------------------------------------------------------------------------
# Full GNNTE forward
# ---------------------------------------------------------------------------
def gnnte_forward(x, edge_index, batch, num_graphs, params, *, final_relu=False):
    """x: (N, in_ch) f32; edge_index: (2, E) int32 (source_to_target);
    batch: (N,) int32 graph id per node; params: list of (W_l, W_r, b) per layer."""
    N, in_ch = x.shape
    hidden = params[-1][0].shape[1]

    # ---- padding & tile choice (lane-dense, megacore-friendly) ----
    if N <= 512:
        N_pad = _round_up(N, 2 * SUBLANE)
        tm, tk = N_pad // 2, N_pad            # >=2 row tiles so both v7x TCs work
    else:
        N_pad = _round_up(N, 2 * LANE)        # pad to 256, not to the K tile
        tk = next(t for t in (2048, 1024, 512, 256) if N_pad % t == 0)
        tm = next(t for t in (512, 256) if N_pad % t == 0)
    G_pad = _round_up(num_graphs, SUBLANE)
    d_in_pad = _round_up(in_ch, LANE)

    # ---- plain-JAX glue: edges -> dense 0/1 bf16 adjacency + f32 per-row 1/deg ----
    src, dst = edge_index[0], edge_index[1]
    A_pad = jnp.zeros((N_pad, N_pad), jnp.bfloat16).at[dst, src].add(1.0)  # 0/1 exact
    deg = jnp.zeros((N_pad, 1), jnp.float32).at[dst, 0].add(1.0)
    invdeg = jnp.where(deg > 0, 1.0 / jnp.maximum(deg, 1.0), 0.0)
    # TODO(synk): for large, very sparse graphs replace the dense O(N^2) adjacency with
    # a CSR gather + segment-mean path driven by PrefetchScalarGridSpec scalar prefetch.

    # batch vector -> per-graph mean-pooling matrix (padded nodes match no graph)
    batch_pad = jnp.full((N_pad,), -1, jnp.int32).at[:N].set(batch)
    onehot = (batch_pad[None, :] ==
              jnp.arange(G_pad, dtype=jnp.int32)[:, None]).astype(jnp.float32)
    P_pad = onehot / jnp.maximum(onehot.sum(axis=1, keepdims=True), 1.0)

    h = jnp.zeros((N_pad, d_in_pad), jnp.float32).at[:N, :in_ch].set(x)

    # fused, zero-padded parameters: W_cat = [W_l ; W_r], bias as (1, d_out_pad)
    fused = []
    d_in = d_in_pad
    for (wl, wr, b) in params:
        di, do = wl.shape
        d_out = _round_up(do, LANE)
        wl_p = jnp.zeros((d_in, d_out), jnp.float32).at[:di, :do].set(wl)
        wr_p = jnp.zeros((d_in, d_out), jnp.float32).at[:di, :do].set(wr)
        w_cat = jnp.concatenate([wl_p, wr_p], axis=0)
        b_p = jnp.zeros((1, d_out), jnp.float32).at[0, :do].set(b)
        fused.append((w_cat, b_p))
        d_in = d_out

    # ---- 3 tiled SAGE layers + mean pool, all compute inside Pallas ----
    for li, (w_cat, b_p) in enumerate(fused):
        h = _sage_layer(A_pad, invdeg, h, w_cat, b_p, tm=tm, tk=tk,
                        apply_relu=(li < NUM_LAYERS - 1))

    pooled = _mean_pool(P_pad, h, tk=tk, final_relu=final_relu)
    return pooled[:num_graphs, :hidden]


if __name__ == "__main__":
    key = jax.random.PRNGKey(0)

    # Small shapes consistent with GNNTE(initial_embedding_method='sha256',
    # hidden_channels=32, num_layers=3, dropout=0, gnn_type='GraphSAGE', relu=False).
    N_PER_GRAPH = 8
    G = 2
    N = N_PER_GRAPH * G
    IN_CH = 32
    HIDDEN = 32

    k_x, k_w = jax.random.split(key)
    x = jax.random.normal(k_x, (N, IN_CH), jnp.float32)
    batch = jnp.repeat(jnp.arange(G, dtype=jnp.int32), N_PER_GRAPH)

    # deterministic edge_index: bidirectional ring inside each graph
    src_list, dst_list = [], []
    for g in range(G):
        base = g * N_PER_GRAPH
        for i in range(N_PER_GRAPH):
            a_node = base + i
            b_node = base + (i + 1) % N_PER_GRAPH
            src_list += [a_node, b_node]
            dst_list += [b_node, a_node]
    edge_index = jnp.stack([jnp.array(src_list, jnp.int32),
                            jnp.array(dst_list, jnp.int32)])

    # deterministic parameter init (xavier-uniform-like weights, zero biases)
    params = []
    din = IN_CH
    kw = k_w
    for _ in range(NUM_LAYERS):
        kw, k1, k2 = jax.random.split(kw, 3)
        limit = (6.0 / (din + HIDDEN)) ** 0.5
        wl = jax.random.uniform(k1, (din, HIDDEN), jnp.float32, -limit, limit)
        wr = jax.random.uniform(k2, (din, HIDDEN), jnp.float32, -limit, limit)
        b = jnp.zeros((HIDDEN,), jnp.float32)
        params.append((wl, wr, b))
        din = HIDDEN

    out = gnnte_forward(x, edge_index, batch, G, params, final_relu=False)
    out = jax.block_until_ready(out)

    # Pure-JAX reference for the same math (sum-then-divide mean, as in PyG scatter-mean).
    src, dst = edge_index[0], edge_index[1]
    adj = jnp.zeros((N, N), jnp.float32).at[dst, src].add(1.0)
    deg = adj.sum(axis=1, keepdims=True)
    inv = jnp.where(deg > 0, 1.0 / jnp.maximum(deg, 1.0), 0.0)
    onehot = (batch[None, :] == jnp.arange(G)[:, None]).astype(jnp.float32)
    P = onehot / jnp.maximum(onehot.sum(axis=1, keepdims=True), 1.0)
    h_ref = x
    for l, (wl, wr, b) in enumerate(params):
        agg = (adj @ h_ref) * inv
        h_new = agg @ wl + h_ref @ wr + b
        if l < NUM_LAYERS - 1:
            h_new = jnp.maximum(h_new, 0.0)
        h_ref = h_new
    ref = P @ h_ref

    assert out.shape == (G, HIDDEN)
    assert jnp.allclose(out, ref, atol=1e-4, rtol=1e-4), "Pallas output != reference"
    print("KERNEL_OK")
</pallas_src>

<mosaic_0001>
module attributes {stable_mosaic.version = 11 : i64} {
  func.func @sage_layer_kernel(%arg0: i32, %arg1: i32, %arg2: memref<8x16xbf16, #tpu.memory_space<vmem>>, %arg3: memref<8x1xf32, #tpu.memory_space<vmem>>, %arg4: memref<16x128xf32, #tpu.memory_space<vmem>>, %arg5: memref<256x128xf32, #tpu.memory_space<vmem>>, %arg6: memref<1x128xf32, #tpu.memory_space<vmem>>, %arg7: memref<8x128xf32, #tpu.memory_space<vmem>>, %arg8: memref<8x256xf32, #tpu.memory_space<vmem>>) attributes {dimension_semantics = [#tpu.dimension_semantics<parallel>, #tpu.dimension_semantics<arbitrary>], iteration_bounds = array<i64: 2, 1>, scalar_prefetch = 0 : i64, scratch_operands = 1 : i64, tpu.core_type = #tpu.core_type<tc>, window_params = [{transform_indices = @transform_0, window_bounds = array<i64: 8, 16>}, {transform_indices = @transform_1, window_bounds = array<i64: 8, 1>}, {pipeline_mode = #tpu.pipeline_mode<synchronous>, transform_indices = @transform_2, window_bounds = array<i64: 16, 128>}, {pipeline_mode = #tpu.pipeline_mode<synchronous>, transform_indices = @transform_3, window_bounds = array<i64: 256, 128>}, {pipeline_mode = #tpu.pipeline_mode<synchronous>, transform_indices = @transform_4, window_bounds = array<i64: 1, 128>}, {transform_indices = @transform_5, window_bounds = array<i64: 8, 128>}]} {
    %c0_i32 = arith.constant 0 : i32
    %0 = arith.cmpi eq, %arg1, %c0_i32 : i32
    %1 = arith.extui %0 : i1 to i32
    %c0_i32_0 = arith.constant 0 : i32
    %2 = arith.cmpi ne, %1, %c0_i32_0 : i32
    scf.if %2 {
      %cst_9 = arith.constant 0.000000e+00 : f32
      %16 = vector.broadcast %cst_9 : f32 to vector<8x128xf32>
      %c0_10 = arith.constant 0 : index
      %c0_11 = arith.constant 0 : index
      %17 = vector.load %arg8[%c0_10, %c0_11] : memref<8x256xf32, #tpu.memory_space<vmem>>, vector<8x128xf32>
      tpu.vector_store %arg8[%c0_10, %c0_11], %16 {strides = array<i32>} : memref<8x256xf32, #tpu.memory_space<vmem>>, vector<8x128xf32>,
      %c8_i32 = arith.constant 8 : i32
      %18 = arith.muli %arg0, %c8_i32 : i32
      %19 = tpu.assume_multiple %18, 8 : i32
      %20 = arith.index_cast %19 : i32 to index
      %c0_12 = arith.constant 0 : index
      %21 = vector.load %arg4[%20, %c0_12] : memref<16x128xf32, #tpu.memory_space<vmem>>, vector<8x128xf32>
      %c0_13 = arith.constant 0 : index
      %c128 = arith.constant 128 : index
      %22 = vector.load %arg8[%c0_13, %c128] : memref<8x256xf32, #tpu.memory_space<vmem>>, vector<8x128xf32>
      tpu.vector_store %arg8[%c0_13, %c128], %21 {strides = array<i32>} : memref<8x256xf32, #tpu.memory_space<vmem>>, vector<8x128xf32>,
    } else {
    }
    %c16_i32 = arith.constant 16 : i32
    %3 = arith.muli %arg1, %c16_i32 : i32
    %4 = tpu.assume_multiple %3, 16 : i32
    %5 = arith.index_cast %4 : i32 to index
    %c0 = arith.constant 0 : index
    %6 = vector.load %arg4[%5, %c0] : memref<16x128xf32, #tpu.memory_space<vmem>>, vector<16x128xf32>
    %c0_1 = arith.constant 0 : index
    %c0_2 = arith.constant 0 : index
    %7 = vector.load %arg8[%c0_1, %c0_2] : memref<8x256xf32, #tpu.memory_space<vmem>>, vector<8x128xf32>
    %c0_3 = arith.constant 0 : index
    %c0_4 = arith.constant 0 : index
    %8 = vector.load %arg2[%c0_3, %c0_4] : memref<8x16xbf16, #tpu.memory_space<vmem>>, vector<8x16xbf16>
    %9 = arith.extf %8 : vector<8x16xbf16> to vector<8x16xf32>
    %cst = arith.constant dense<0.000000e+00> : vector<8x128xf32>
    %10 = tpu.matmul %9, %6, %cst {dimension_numbers = #tpu.dot_dimension_numbers<[1], [0], [0], [1], [0, 0, 1, 1], [], []>} : vector<8x16xf32>, vector<16x128xf32>, vector<8x128xf32> -> vector<8x128xf32>
    %11 = arith.addf %7, %10 : vector<8x128xf32>
    %c0_5 = arith.constant 0 : index
    %c0_6 = arith.constant 0 : index
    %12 = vector.load %arg8[%c0_5, %c0_6] : memref<8x256xf32, #tpu.memory_space<vmem>>, vector<8x128xf32>
    tpu.vector_store %arg8[%c0_5, %c0_6], %11 {strides = array<i32>} : memref<8x256xf32, #tpu.memory_space<vmem>>, vector<8x128xf32>,
    %c0_i32_7 = arith.constant 0 : i32
    %13 = arith.cmpi eq, %arg1, %c0_i32_7 : i32
    %14 = arith.extui %13 : i1 to i32
    %c0_i32_8 = arith.constant 0 : i32
    %15 = arith.cmpi ne, %14, %c0_i32_8 : i32
    scf.if %15 {
      %c0_9 = arith.constant 0 : index
      %c0_10 = arith.constant 0 : index
      %16 = vector.load %arg8[%c0_9, %c0_10] : memref<8x256xf32, #tpu.memory_space<vmem>>, vector<8x128xf32>
      %c0_11 = arith.constant 0 : index
      %c0_12 = arith.constant 0 : index
      %17 = vector.load %arg3[%c0_11, %c0_12] : memref<8x1xf32, #tpu.memory_space<vmem>>, vector<8x1xf32>
      %18 = vector.broadcast %17 : vector<8x1xf32> to vector<8x128xf32>
      %19 = arith.mulf %16, %18 : vector<8x128xf32>
      %c0_13 = arith.constant 0 : index
      %c0_14 = arith.constant 0 : index
      %20 = vector.load %arg8[%c0_13, %c0_14] : memref<8x256xf32, #tpu.memory_space<vmem>>, vector<8x128xf32>
      tpu.vector_store %arg8[%c0_13, %c0_14], %19 {strides = array<i32>} : memref<8x256xf32, #tpu.memory_space<vmem>>, vector<8x128xf32>,
      %c0_15 = arith.constant 0 : index
      %c0_16 = arith.constant 0 : index
      %21 = vector.load %arg8[%c0_15, %c0_16] : memref<8x256xf32, #tpu.memory_space<vmem>>, vector<8x256xf32>
      %c0_17 = arith.constant 0 : index
      %c0_18 = arith.constant 0 : index
      %22 = vector.load %arg5[%c0_17, %c0_18] : memref<256x128xf32, #tpu.memory_space<vmem>>, vector<256x128xf32>
      %cst_19 = arith.constant dense<0.000000e+00> : vector<8x128xf32>
      %23 = tpu.matmul %21, %22, %cst_19 {dimension_numbers = #tpu.dot_dimension_numbers<[1], [0], [0], [1], [0, 0, 1, 1], [], []>} : vector<8x256xf32>, vector<256x128xf32>, vector<8x128xf32> -> vector<8x128xf32>
      %c0_20 = arith.constant 0 : index
      %c0_21 = arith.constant 0 : index
      %24 = vector.load %arg6[%c0_20, %c0_21] : memref<1x128xf32, #tpu.memory_space<vmem>>, vector<1x128xf32>
      %25 = vector.broadcast %24 : vector<1x128xf32> to vector<8x128xf32>
      %26 = arith.addf %23, %25 : vector<8x128xf32>
      %cst_22 = arith.constant 0.000000e+00 : f32
      %27 = vector.broadcast %cst_22 : f32 to vector<8x128xf32>
      %28 = arith.maximumf %26, %27 : vector<8x128xf32>
      %c0_23 = arith.constant 0 : index
      %c0_24 = arith.constant 0 : index
      %29 = vector.load %arg7[%c0_23, %c0_24] : memref<8x128xf32, #tpu.memory_space<vmem>>, vector<8x128xf32>
      tpu.vector_store %arg7[%c0_23, %c0_24], %28 {strides = array<i32>} : memref<8x128xf32, #tpu.memory_space<vmem>>, vector<8x128xf32>,
    } else {
    }
    return
  }
  func.func @transform_0(%arg0: i32, %arg1: i32) -> (i32, i32) {
    %c0_i32 = arith.constant 0 : i32
    return %arg0, %arg1 : i32, i32
  }
  func.func @transform_1(%arg0: i32, %arg1: i32) -> (i32, i32) {
    %c0_i32 = arith.constant 0 : i32
    %c0_i32_0 = arith.constant 0 : i32
    return %arg0, %c0_i32 : i32, i32
  }
  func.func @transform_2(%arg0: i32, %arg1: i32) -> (i32, i32) {
    %c0_i32 = arith.constant 0 : i32
    %c0_i32_0 = arith.constant 0 : i32
    %c0_i32_1 = arith.constant 0 : i32
    return %c0_i32, %c0_i32_0 : i32, i32
  }
  func.func @transform_3(%arg0: i32, %arg1: i32) -> (i32, i32) {
    %c0_i32 = arith.constant 0 : i32
    %c0_i32_0 = arith.constant 0 : i32
    %c0_i32_1 = arith.constant 0 : i32
    return %c0_i32, %c0_i32_0 : i32, i32
  }
  func.func @transform_4(%arg0: i32, %arg1: i32) -> (i32, i32) {
    %c0_i32 = arith.constant 0 : i32
    %c0_i32_0 = arith.constant 0 : i32
    %c0_i32_1 = arith.constant 0 : i32
    return %c0_i32, %c0_i32_0 : i32, i32
  }
  func.func @transform_5(%arg0: i32, %arg1: i32) -> (i32, i32) {
    %c0_i32 = arith.constant 0 : i32
    %c0_i32_0 = arith.constant 0 : i32
    return %arg0, %c0_i32 : i32, i32
  }
}

module attributes {stable_mosaic.version = 11 : i64} {
  func.func @sage_layer_kernel(%arg0: i32, %arg1: i32, %arg2: memref<8x16xbf16, #tpu.memory_space<vmem>>, %arg3: memref<8x1xf32, #tpu.memory_space<vmem>>, %arg4: memref<16x128xf32, #tpu.memory_space<vmem>>, %arg5: memref<256x128xf32, #tpu.memory_space<vmem>>, %arg6: memref<1x128xf32, #tpu.memory_space<vmem>>, %arg7: memref<8x128xf32, #tpu.memory_space<vmem>>, %arg8: memref<8x256xf32, #tpu.memory_space<vmem>>) attributes {dimension_semantics = [#tpu.dimension_semantics<parallel>, #tpu.dimension_semantics<arbitrary>], iteration_bounds = array<i64: 2, 1>, scalar_prefetch = 0 : i64, scratch_operands = 1 : i64, tpu.core_type = #tpu.core_type<tc>, window_params = [{transform_indices = @transform_0, window_bounds = array<i64: 8, 16>}, {transform_indices = @transform_1, window_bounds = array<i64: 8, 1>}, {pipeline_mode = #tpu.pipeline_mode<synchronous>, transform_indices = @transform_2, window_bounds = array<i64: 16, 128>}, {pipeline_mode = #tpu.pipeline_mode<synchronous>, transform_indices = @transform_3, window_bounds = array<i64: 256, 128>}, {pipeline_mode = #tpu.pipeline_mode<synchronous>, transform_indices = @transform_4, window_bounds = array<i64: 1, 128>}, {transform_indices = @transform_5, window_bounds = array<i64: 8, 128>}]} {
    %c0_i32 = arith.constant 0 : i32
    %0 = arith.cmpi eq, %arg1, %c0_i32 : i32
    %1 = arith.extui %0 : i1 to i32
    %c0_i32_0 = arith.constant 0 : i32
    %2 = arith.cmpi ne, %1, %c0_i32_0 : i32
    scf.if %2 {
      %cst_9 = arith.constant 0.000000e+00 : f32
      %16 = vector.broadcast %cst_9 : f32 to vector<8x128xf32>
      %c0_10 = arith.constant 0 : index
      %c0_11 = arith.constant 0 : index
      %17 = vector.load %arg8[%c0_10, %c0_11] : memref<8x256xf32, #tpu.memory_space<vmem>>, vector<8x128xf32>
      tpu.vector_store %arg8[%c0_10, %c0_11], %16 {strides = array<i32>} : memref<8x256xf32, #tpu.memory_space<vmem>>, vector<8x128xf32>,
      %c8_i32 = arith.constant 8 : i32
      %18 = arith.muli %arg0, %c8_i32 : i32
      %19 = tpu.assume_multiple %18, 8 : i32
      %20 = arith.index_cast %19 : i32 to index
      %c0_12 = arith.constant 0 : index
      %21 = vector.load %arg4[%20, %c0_12] : memref<16x128xf32, #tpu.memory_space<vmem>>, vector<8x128xf32>
      %c0_13 = arith.constant 0 : index
      %c128 = arith.constant 128 : index
      %22 = vector.load %arg8[%c0_13, %c128] : memref<8x256xf32, #tpu.memory_space<vmem>>, vector<8x128xf32>
      tpu.vector_store %arg8[%c0_13, %c128], %21 {strides = array<i32>} : memref<8x256xf32, #tpu.memory_space<vmem>>, vector<8x128xf32>,
    } else {
    }
    %c16_i32 = arith.constant 16 : i32
    %3 = arith.muli %arg1, %c16_i32 : i32
    %4 = tpu.assume_multiple %3, 16 : i32
    %5 = arith.index_cast %4 : i32 to index
    %c0 = arith.constant 0 : index
    %6 = vector.load %arg4[%5, %c0] : memref<16x128xf32, #tpu.memory_space<vmem>>, vector<16x128xf32>
    %c0_1 = arith.constant 0 : index
    %c0_2 = arith.constant 0 : index
    %7 = vector.load %arg8[%c0_1, %c0_2] : memref<8x256xf32, #tpu.memory_space<vmem>>, vector<8x128xf32>
    %c0_3 = arith.constant 0 : index
    %c0_4 = arith.constant 0 : index
    %8 = vector.load %arg2[%c0_3, %c0_4] : memref<8x16xbf16, #tpu.memory_space<vmem>>, vector<8x16xbf16>
    %9 = arith.extf %8 : vector<8x16xbf16> to vector<8x16xf32>
    %cst = arith.constant dense<0.000000e+00> : vector<8x128xf32>
    %10 = tpu.matmul %9, %6, %cst {dimension_numbers = #tpu.dot_dimension_numbers<[1], [0], [0], [1], [0, 0, 1, 1], [], []>} : vector<8x16xf32>, vector<16x128xf32>, vector<8x128xf32> -> vector<8x128xf32>
    %11 = arith.addf %7, %10 : vector<8x128xf32>
    %c0_5 = arith.constant 0 : index
    %c0_6 = arith.constant 0 : index
    %12 = vector.load %arg8[%c0_5, %c0_6] : memref<8x256xf32, #tpu.memory_space<vmem>>, vector<8x128xf32>
    tpu.vector_store %arg8[%c0_5, %c0_6], %11 {strides = array<i32>} : memref<8x256xf32, #tpu.memory_space<vmem>>, vector<8x128xf32>,
    %c0_i32_7 = arith.constant 0 : i32
    %13 = arith.cmpi eq, %arg1, %c0_i32_7 : i32
    %14 = arith.extui %13 : i1 to i32
    %c0_i32_8 = arith.constant 0 : i32
    %15 = arith.cmpi ne, %14, %c0_i32_8 : i32
    scf.if %15 {
      %c0_9 = arith.constant 0 : index
      %c0_10 = arith.constant 0 : index
      %16 = vector.load %arg8[%c0_9, %c0_10] : memref<8x256xf32, #tpu.memory_space<vmem>>, vector<8x128xf32>
      %c0_11 = arith.constant 0 : index
      %c0_12 = arith.constant 0 : index
      %17 = vector.load %arg3[%c0_11, %c0_12] : memref<8x1xf32, #tpu.memory_space<vmem>>, vector<8x1xf32>
      %18 = vector.broadcast %17 : vector<8x1xf32> to vector<8x128xf32>
      %19 = arith.mulf %16, %18 : vector<8x128xf32>
      %c0_13 = arith.constant 0 : index
      %c0_14 = arith.constant 0 : index
      %20 = vector.load %arg8[%c0_13, %c0_14] : memref<8x256xf32, #tpu.memory_space<vmem>>, vector<8x128xf32>
      tpu.vector_store %arg8[%c0_13, %c0_14], %19 {strides = array<i32>} : memref<8x256xf32, #tpu.memory_space<vmem>>, vector<8x128xf32>,
      %c0_15 = arith.constant 0 : index
      %c0_16 = arith.constant 0 : index
      %21 = vector.load %arg8[%c0_15, %c0_16] : memref<8x256xf32, #tpu.memory_space<vmem>>, vector<8x256xf32>
      %c0_17 = arith.constant 0 : index
      %c0_18 = arith.constant 0 : index
      %22 = vector.load %arg5[%c0_17, %c0_18] : memref<256x128xf32, #tpu.memory_space<vmem>>, vector<256x128xf32>
      %cst_19 = arith.constant dense<0.000000e+00> : vector<8x128xf32>
      %23 = tpu.matmul %21, %22, %cst_19 {dimension_numbers = #tpu.dot_dimension_numbers<[1], [0], [0], [1], [0, 0, 1, 1], [], []>} : vector<8x256xf32>, vector<256x128xf32>, vector<8x128xf32> -> vector<8x128xf32>
      %c0_20 = arith.constant 0 : index
      %c0_21 = arith.constant 0 : index
      %24 = vector.load %arg6[%c0_20, %c0_21] : memref<1x128xf32, #tpu.memory_space<vmem>>, vector<1x128xf32>
      %25 = vector.broadcast %24 : vector<1x128xf32> to vector<8x128xf32>
      %26 = arith.addf %23, %25 : vector<8x128xf32>
      %cst_22 = arith.constant 0.000000e+00 : f32
      %27 = vector.broadcast %cst_22 : f32 to vector<8x128xf32>
      %28 = arith.maximumf %26, %27 : vector<8x128xf32>
      %c0_23 = arith.constant 0 : index
      %c0_24 = arith.constant 0 : index
      %29 = vector.load %arg7[%c0_23, %c0_24] : memref<8x128xf32, #tpu.memory_space<vmem>>, vector<8x128xf32>
      tpu.vector_store %arg7[%c0_23, %c0_24], %28 {strides = array<i32>} : memref<8x128xf32, #tpu.memory_space<vmem>>, vector<8x128xf32>,
    } else {
    }
    return
  }
  func.func @transform_0(%arg0: i32, %arg1: i32) -> (i32, i32) {
    %c0_i32 = arith.constant 0 : i32
    return %arg0, %arg1 : i32, i32
  }
  func.func @transform_1(%arg0: i32, %arg1: i32) -> (i32, i32) {
    %c0_i32 = arith.constant 0 : i32
    %c0_i32_0 = arith.constant 0 : i32
    return %arg0, %c0_i32 : i32, i32
  }
  func.func @transform_2(%arg0: i32, %arg1: i32) -> (i32, i32) {
    %c0_i32 = arith.constant 0 : i32
    %c0_i32_0 = arith.constant 0 : i32
    %c0_i32_1 = arith.constant 0 : i32
    return %c0_i32, %c0_i32_0 : i32, i32
  }
  func.func @transform_3(%arg0: i32, %arg1: i32) -> (i32, i32) {
    %c0_i32 = arith.constant 0 : i32
    %c0_i32_0 = arith.constant 0 : i32
    %c0_i32_1 = arith.constant 0 : i32
    return %c0_i32, %c0_i32_0 : i32, i32
  }
  func.func @transform_4(%arg0: i32, %arg1: i32) -> (i32, i32) {
    %c0_i32 = arith.constant 0 : i32
    %c0_i32_0 = arith.constant 0 : i32
    %c0_i32_1 = arith.constant 0 : i32
    return %c0_i32, %c0_i32_0 : i32, i32
  }
  func.func @transform_5(%arg0: i32, %arg1: i32) -> (i32, i32) {
    %c0_i32 = arith.constant 0 : i32
    %c0_i32_0 = arith.constant 0 : i32
    return %arg0, %c0_i32 : i32, i32
  }
}

</mosaic_0001>

<llo_original>
// kernel: tpu_custom_call.1
$region0: #{tpu_custom_call.1}
  #allocation0 [shape = 'u32[]', space=smem, size = 0x4, offset = 0x4, fixed_abs, tag = 'smem constant byte address 0x4 - core index']
  #allocation1 [shape = 'u32[72,128]{1,0:T(1,128)}', space=vmem, size = 0x9000, scoped, tag = 'internal scratch']
  #allocation2 [shape = 'f32[8,256]{1,0:T(8,128)}', space=vmem, size = 0x2000, scoped, tag = 'scratch operand']
  %s0 = inlined_call_operand.hbm [shape: bf16[16,16], index: 0, kind: input, shape index: {}]
  %s1 = inlined_call_operand.vmem [shape: f32[16,1], index: 1, kind: input, shape index: {}]
  %s2 = inlined_call_operand.vmem [shape: f32[16,128], index: 2, kind: input, shape index: {}]
  %s3 = inlined_call_operand.hbm [shape: f32[256,128], index: 3, kind: input, shape index: {}]
  %s4 = inlined_call_operand.vmem [shape: f32[1,128], index: 4, kind: input, shape index: {}]
  %s5 = inlined_call_operand.hbm [shape: f32[16,128], index: 5, kind: output, shape index: {}]
  %s6 = sld [smem:[#allocation0]]
  $region69: #{tpu_custom_call.1} parent=0
    _
  %s8 = ssub.s32 1, %s6
  %s9 = scalar_select 0, %s8, %s6
  $region1: #{tpu_custom_call.1} parent=0
    #allocation3 [shape = 'u8[4096]{0}', space=vmem, size = 0x1000, scoped, tag = 'input window, operand 0']
    #allocation4 [shape = 's32[2]{0}', space=sflag, size = 0x8, scoped, tag = 'scoped memory for tpu_custom_call.1']
    #allocation5 [shape = 's32[2]{0}', space=sflag, size = 0x8, scoped, tag = 'scoped memory for tpu_custom_call.1']
    #allocation6 [shape = 'u8[131072]{0}', space=vmem, size = 0x20000, scoped, tag = 'input window, operand 3, single buffered']
    #allocation7 [shape = 's32[1]{0}', space=sflag, size = 0x4, scoped, tag = 'scoped memory for tpu_custom_call.1']
    #allocation8 [shape = 'u8[8192]{0}', space=vmem, size = 0x2000, scoped, tag = 'output window, operand 0']
    %10 = vsyncpa [#allocation4], 0
    %s11 = scalar_lea.sflag [#allocation4], 1
    %12 = vsyncpa %s11, 0
    %13 = vsyncpa [#allocation7], 0
    %14 = vsyncpa [#allocation5], 0
    %s15 = scalar_lea.sflag [#allocation5], 1
    %16 = vsyncpa %s15, 0
    loop: start=0, step=1, limit=4
    $region2: #{tpu_custom_call.1} parent=1 // loop_pre_header
      _
    $region3: #{tpu_custom_call.1} parent=1 // loop_header
      %s18 = sphi 0, %s22
      %p19 = scmp.ge.s32.totalorder %s18, 4
      %s25 = sphi 0, %s37
      %s26 = sphi 0, %s33
      %s27 = sphi 0, %s25
      %s28 = sphi 0, %s26
      %s29 = sphi 0, %s27
      %s30 = sphi 0, %s28
      %s42 = sphi 0, %s44
      %s45 = sphi 0, %s42
      %s46 = sphi 0, %s45
      %s62 = sphi 0, %s46
      %s68 = sphi 0, %s70
      %s71 = sphi 0, %s68
      %s72 = sphi 0, %s71
      %s88 = sphi 0, %s72
      %s92 = sphi 0, %s92
      %s94 = sphi 0, %s92
      %s95 = sphi 0, %s94
      %s109 = sphi 0, %s95
      %s113 = sphi 0, %s113
      %s115 = sphi 0, %s113
      %s116 = sphi 0, %s115
      %s130 = sphi 0, %s116
      %s134 = sphi 0, %s134
      %s136 = sphi 0, %s134
      %s137 = sphi 0, %s136
      %s151 = sphi 0, %s137
      %s157 = sphi 0, %s159
      %s160 = sphi 0, %s157
      %s161 = sphi 0, %s160
      %s177 = sphi 0, %s161
    $region4: #{tpu_custom_call.1} parent=1 // loop_header_branch
      %21 = sbr.rel (%p19) target = $region8
    $region5: #{tpu_custom_call.1} parent=1 // loop_body
      %s23 = ssub.s32 %s18, 1
      %s24 = ssub.s32 %s18, 2
      %s31 = sadd.s32 1, %s26
      %p32 = scmp.ge.s32.totalorder %s31, 1
      %s33 = scalar_select %p32, 0, %s31
      %s34 = sadd.s32 1, %s25
      %s35 = scalar_select %p32, %s34, %s25
      %p36 = scmp.ge.s32.totalorder %s35, 2
      %s37 = scalar_select %p36, 0, %s35
      %s38 = ssub.s32 %s25, %s37
      %s39 = ssub.s32 %s26, %s33
      %s40 = sor.u32 %s38, %s39
      %p41 = scmp.eq.s32.totalorder %s40, 0
      %s43 = sadd.s32 %s42, 1
      %s44 = scalar_select %p41, %s42, %s43
      %p47 = pneg %p41
      %p48 = scmp.eq.s32.totalorder %s18, 1
      %p49 = por %p47, %p48
      %p50 = scmp.ne.s32.totalorder %s42, %s45
      %p51 = scmp.eq.s32.totalorder %s18, 0
      %p52 = por %p50, %p51
      %p53 = scmp.ne.s32.totalorder %s42, %s45
      %p54 = scmp.eq.s32.totalorder %s23, 1
      %p55 = por %p53, %p54
      %p56 = scmp.ne.s32.totalorder %s45, %s46
      %p57 = scmp.eq.s32.totalorder %s23, 0
      %p58 = por %p56, %p57
      %p59 = scmp.ne.s32.totalorder %s45, %s46
      %p60 = scmp.eq.s32.totalorder %s24, 1
      %p61 = por %p59, %p60
      %p63 = scmp.ne.s32.totalorder %s46, %s62
      %p64 = scmp.eq.s32.totalorder %s24, 0
      %p65 = por %p63, %p64
      %s66 = ssub.s32 %s25, %s37
      %p67 = scmp.eq.s32.totalorder %s66, 0
      %s69 = sadd.s32 %s68, 1
      %s70 = scalar_select %p67, %s68, %s69
      %p73 = pneg %p67
      %p74 = scmp.eq.s32.totalorder %s18, 1
      %p75 = por %p73, %p74
      %p76 = scmp.ne.s32.totalorder %s68, %s71
      %p77 = scmp.eq.s32.totalorder %s18, 0
      %p78 = por %p76, %p77
      %p79 = scmp.ne.s32.totalorder %s68, %s71
      %p80 = scmp.eq.s32.totalorder %s23, 1
      %p81 = por %p79, %p80
      %p82 = scmp.ne.s32.totalorder %s71, %s72
      %p83 = scmp.eq.s32.totalorder %s23, 0
      %p84 = por %p82, %p83
      %p85 = scmp.ne.s32.totalorder %s71, %s72
      %p86 = scmp.eq.s32.totalorder %s24, 1
      %p87 = por %p85, %p86
      %p89 = scmp.ne.s32.totalorder %s72, %s88
      %p90 = scmp.eq.s32.totalorder %s24, 0
      %p91 = por %p89, %p90
      %s93 = sadd.s32 %s92, 1
      %p96 = scmp.eq.s32.totalorder %s18, 1
      %p97 = scmp.ne.s32.totalorder %s92, %s94
      %p98 = scmp.eq.s32.totalorder %s18, 0
      %p99 = por %p97, %p98
      %p100 = scmp.ne.s32.totalorder %s92, %s94
      %p101 = scmp.eq.s32.totalorder %s23, 1
      %p102 = por %p100, %p101
      %p103 = scmp.ne.s32.totalorder %s94, %s95
      %p104 = scmp.eq.s32.totalorder %s23, 0
      %p105 = por %p103, %p104
      %p106 = scmp.ne.s32.totalorder %s94, %s95
      %p107 = scmp.eq.s32.totalorder %s24, 1
      %p108 = por %p106, %p107
      %p110 = scmp.ne.s32.totalorder %s95, %s109
      %p111 = scmp.eq.s32.totalorder %s24, 0
      %p112 = por %p110, %p111
      %s114 = sadd.s32 %s113, 1
      %p117 = scmp.eq.s32.totalorder %s18, 1
      %p118 = scmp.ne.s32.totalorder %s113, %s115
      %p119 = scmp.eq.s32.totalorder %s18, 0
      %p120 = por %p118, %p119
      %p121 = scmp.ne.s32.totalorder %s113, %s115
      %p122 = scmp.eq.s32.totalorder %s23, 1
      %p123 = por %p121, %p122
      %p124 = scmp.ne.s32.totalorder %s115, %s116
      %p125 = scmp.eq.s32.totalorder %s23, 0
      %p126 = por %p124, %p125
      %p127 = scmp.ne.s32.totalorder %s115, %s116
      %p128 = scmp.eq.s32.totalorder %s24, 1
      %p129 = por %p127, %p128
      %p131 = scmp.ne.s32.totalorder %s116, %s130
      %p132 = scmp.eq.s32.totalorder %s24, 0
      %p133 = por %p131, %p132
      %s135 = sadd.s32 %s134, 1
      %p138 = scmp.eq.s32.totalorder %s18, 1
      %p139 = scmp.ne.s32.totalorder %s134, %s136
      %p140 = scmp.eq.s32.totalorder %s18, 0
      %p141 = por %p139, %p140
      %p142 = scmp.ne.s32.totalorder %s134, %s136
      %p143 = scmp.eq.s32.totalorder %s23, 1
      %p144 = por %p142, %p143
      %p145 = scmp.ne.s32.totalorder %s136, %s137
      %p146 = scmp.eq.s32.totalorder %s23, 0
      %p147 = por %p145, %p146
      %p148 = scmp.ne.s32.totalorder %s136, %s137
      %p149 = scmp.eq.s32.totalorder %s24, 1
      %p150 = por %p148, %p149
      %p152 = scmp.ne.s32.totalorder %s137, %s151
      %p153 = scmp.eq.s32.totalorder %s24, 0
      %p154 = por %p152, %p153
      %s155 = ssub.s32 %s25, %s37
      %p156 = scmp.eq.s32.totalorder %s155, 0
      %s158 = sadd.s32 %s157, 1
      %s159 = scalar_select %p156, %s157, %s158
      %p162 = pneg %p156
      %p163 = scmp.eq.s32.totalorder %s18, 1
      %p164 = por %p162, %p163
      %p165 = scmp.ne.s32.totalorder %s157, %s160
      %p166 = scmp.eq.s32.totalorder %s18, 0
      %p167 = por %p165, %p166
      %p168 = scmp.ne.s32.totalorder %s157, %s160
      %p169 = scmp.eq.s32.totalorder %s23, 1
      %p170 = por %p168, %p169
      %p171 = scmp.ne.s32.totalorder %s160, %s161
      %p172 = scmp.eq.s32.totalorder %s23, 0
      %p173 = por %p171, %p172
      %p174 = scmp.ne.s32.totalorder %s160, %s161
      %p175 = scmp.eq.s32.totalorder %s24, 1
      %p176 = por %p174, %p175
      %p178 = scmp.ne.s32.totalorder %s161, %s177
      %p179 = scmp.eq.s32.totalorder %s24, 0
      %p180 = por %p178, %p179
      %p181 = scmp.le.s32.totalorder 1, %s18
      %p182 = scmp.lt.s32.totalorder %s18, 3
      %p183 = pnand %p181, %p182
      %p184 = pneg %p183
      // Predicated region
      $region9: #{tpu_custom_call.1} parent=5 // pred_check
        _
      $region10: #{tpu_custom_call.1} parent=5 // pred_check_branch
        %186 = sbr.rel (%p183) target = $region12
      $region11: #{tpu_custom_call.1} parent=5 // pred_region
        %s187 = ssub.s32 %s18, 1
        // Predicated region
        $region13: #{tpu_custom_call.1} parent=11 // pred_check
          %p188 = pneg %p105
        $region14: #{tpu_custom_call.1} parent=11 // pred_check_branch
          %190 = sbr.rel (%p188) target = $region16
        $region15: #{tpu_custom_call.1} parent=11 // pred_region
          _
        $region16: #{tpu_custom_call.1} parent=11 // pred_fallthru
          _
        // Predicated region
        $region17: #{tpu_custom_call.1} parent=11 // pred_check
          %p191 = pneg %p126
        $region18: #{tpu_custom_call.1} parent=11 // pred_check_branch
          %193 = sbr.rel (%p191) target = $region20
        $region19: #{tpu_custom_call.1} parent=11 // pred_region
          %195 = vsyncadd [#allocation7], 0
          %s196 = sshll.u32 %s3, 4
          %s197 = int_to_ptr.hbm [resolvable:$true] %s196
          %s198 = sshll.u32 [#allocation6], 4
          %s199 = int_to_ptr.vmem [resolvable:$true] %s198
          %204 = dma.hbm_to_vmem [thread:$0]  %s197, 4096, %s199, [#allocation7], 128, 128, 8
        $region20: #{tpu_custom_call.1} parent=11 // pred_fallthru
          _
        // Predicated region
        $region21: #{tpu_custom_call.1} parent=11 // pred_check
          %p205 = pneg %p147
        $region22: #{tpu_custom_call.1} parent=11 // pred_check_branch
          %207 = sbr.rel (%p205) target = $region24
        $region23: #{tpu_custom_call.1} parent=11 // pred_region
          _
        $region24: #{tpu_custom_call.1} parent=11 // pred_fallthru
          _
      $region12: #{tpu_custom_call.1} parent=5 // pred_fallthru
        _
      %p208 = scmp.lt.s32.totalorder %s18, 2
      // Predicated region
      $region25: #{tpu_custom_call.1} parent=5 // pred_check
        %p209 = pneg %p208
      $region26: #{tpu_custom_call.1} parent=5 // pred_check_branch
        %211 = sbr.rel (%p209) target = $region28
      $region27: #{tpu_custom_call.1} parent=5 // pred_region
        // Predicated region
        $region29: #{tpu_custom_call.1} parent=27 // pred_check
          %p212 = pneg %p52
        $region30: #{tpu_custom_call.1} parent=27 // pred_check_branch
          %214 = sbr.rel (%p212) target = $region32
        $region31: #{tpu_custom_call.1} parent=27 // pred_region
          %s215 = sand.u32 %s42, 1
          %s216 = scalar_lea.sflag [#allocation4], %s215
          %s217 = sand.u32 %s42, 1
          %s218 = smul.addr %s217, 4
          %s219 = scalar_lea.vmem [#allocation3], %s218
          %221 = vsyncadd %s216, 0
          %s222 = sadd.s32 %s26, %s25
          %s223 = smul.addr %s222, 4
          %s224 = scalar_lea.hbm %s0, %s223
          %s226 = sshll.u32 %s224, 4
          %s227 = int_to_ptr.hbm [resolvable:$true] %s226
          %s228 = sshll.u32 %s219, 4
          %s229 = int_to_ptr.vmem [resolvable:$true] %s228
          %231 = dma.hbm_to_vmem [thread:$0]  %s227, 64, %s229, %s216
        $region32: #{tpu_custom_call.1} parent=27 // pred_fallthru
          _
        // Predicated region
        $region33: #{tpu_custom_call.1} parent=27 // pred_check
          %p232 = pneg %p78
        $region34: #{tpu_custom_call.1} parent=27 // pred_check_branch
          %234 = sbr.rel (%p232) target = $region36
        $region35: #{tpu_custom_call.1} parent=27 // pred_region
          %p235 = scmp.lt.s32.totalorder %s25, 1
          %s236 = scalar_select %p235, %s25, 1
          %s237 = smul.addr %s236, 8
          %s238 = scalar_lea.vmem %s1, %s237
        $region36: #{tpu_custom_call.1} parent=27 // pred_fallthru
          _
      $region28: #{tpu_custom_call.1} parent=5 // pred_fallthru
        _
      %p239 = scmp.le.s32.totalorder 1, %s18
      %p240 = scmp.lt.s32.totalorder %s18, 3
      %p241 = pnand %p239, %p240
      %p242 = pneg %p241
      // Predicated region
      $region37: #{tpu_custom_call.1} parent=5 // pred_check
        _
      $region38: #{tpu_custom_call.1} parent=5 // pred_check_branch
        %244 = sbr.rel (%p241) target = $region40
      $region39: #{tpu_custom_call.1} parent=5 // pred_region
        %s245 = ssub.s32 %s18, 1
        %s246 = sand.u32 %s45, 1
        %s247 = scalar_lea.sflag [#allocation4], %s246
        %s248 = sand.u32 %s45, 1
        %s249 = smul.addr %s248, 4
        %s250 = scalar_lea.vmem [#allocation3], %s249
        // Predicated region
        $region41: #{tpu_custom_call.1} parent=39 // pred_check
          %p251 = pneg %p58
        $region42: #{tpu_custom_call.1} parent=39 // pred_check_branch
          %253 = sbr.rel (%p251) target = $region44
        $region43: #{tpu_custom_call.1} parent=39 // pred_region
          %255 = dma.done %s247, 64
        $region44: #{tpu_custom_call.1} parent=39 // pred_fallthru
          _
        // Predicated region
        $region45: #{tpu_custom_call.1} parent=39 // pred_check
          %p256 = pneg %p126
        $region46: #{tpu_custom_call.1} parent=39 // pred_check_branch
          %258 = sbr.rel (%p256) target = $region48
        $region47: #{tpu_custom_call.1} parent=39 // pred_region
          %260 = dma.done [#allocation7], 4096
        $region48: #{tpu_custom_call.1} parent=39 // pred_fallthru
          _
        %s261 = sand.u32 %s45, 1
        %s262 = scalar_lea.sflag [#allocation4], %s261
        %s263 = sand.u32 %s45, 1
        %s264 = smul.addr %s263, 4
        %s265 = scalar_lea.vmem [#allocation3], %s264
        %p266 = pneg %p58
        %p267 = pneg %p55
        %p268 = scmp.lt.s32.totalorder %s27, 1
        %s269 = scalar_select %p268, %s27, 1
        %s270 = smul.addr %s269, 8
        %s271 = scalar_lea.vmem %s1, %s270
        %p272 = pneg %p84
        %p273 = pneg %p81
        %p274 = pneg %p105
        %p275 = pneg %p102
        %p276 = pneg %p126
        %p277 = pneg %p123
        %p278 = pneg %p147
        %p279 = pneg %p144
        %p280 = pneg %p173
        %p281 = pneg %p170
        %s282 = sand.u32 %s160, 1
        %s283 = scalar_lea.sflag [#allocation5], %s282
        %s284 = sand.u32 %s160, 1
        %s285 = smul.addr %s284, 8
        %s286 = scalar_lea.vmem [#allocation8], %s285
        %p287 = scmp.lt.s32.totalorder %s27, 1
        %s288 = scalar_select %p287, %s27, 1
        %s289 = smul.addr %s288, 8
        %s290 = scalar_lea.vmem %s1, %s289
        %p291 = scmp.eq.s32.totalorder %s28, 0
        // Predicated region
        $region49: #{tpu_custom_call.1} parent=39 // pred_check
          %p292 = pneg %p291
        $region50: #{tpu_custom_call.1} parent=39 // pred_check_branch
          %294 = sbr.rel (%p292) target = $region52
        $region51: #{tpu_custom_call.1} parent=39 // pred_region
          %295 = vst [vmem:[#allocation2] sm:$0xff] 0.0
          %s296 = smul.u32 %s27, 8
          %s297 = scalar_lea.vmem %s2, %s296
          %v298 = vld [vmem:[%s297] sm:$0xff]
          %299 = vst [vmem:[#allocation2 + $0x8] sm:$0xff] %v298
        $region52: #{tpu_custom_call.1} parent=39 // pred_fallthru
          _
        %s300 = smul.u32 %s28, 16
        %s301 = scalar_lea.vmem %s2, %s300
        %v302 = vld [vmem:[%s301] sm:$0xff]
        %v303 = vld [vmem:[%s301 + $0x8] sm:$0xff]
        %v304 = vld [vmem:[#allocation2] sm:$0xff]
        %v305 = vld [vmem:[%s250] sm:$0xf]
        %v306 = vunpack.c.l.bf16 %v305
        %vm307 = vcmask 130048
        %v309 = vsel %vm307, %v306, 0
        %311 = vmatpush.msra.mxu0 0.0
        %312 = vmatpush.msra.mxu0 0.0
        %313 = vmatpush.msra.mxu0 0.0
        %314 = vmatpush.msra.mxu0 0.0
        %315 = vmatpush.msra.mxu0 0.0
        %316 = vmatpush.msra.mxu0 0.0
        %317 = vmatpush.msra.mxu0 0.0
        %318 = vmatpush.msra.mxu0 0.0
        %319 = vmatpush.msra.mxu0 0.0
        %320 = vmatpush.msra.mxu0 0.0
        %321 = vmatpush.msra.mxu0 0.0
        %322 = vmatpush.msra.mxu0 0.0
        %323 = vmatpush.msra.mxu0 0.0
        %324 = vmatpush.msra.mxu0 0.0
        %325 = vmatpush.msra.mxu0 %v303
        %326 = vmatpush.msra.mxu0 %v302
        %327 = vmatmul.f32.gmra.mxu0 %v309
        %v328 = vpop.f32.mrf.mxu0
        %v329 = vadd.f32 0.0, %v328
        %330 = vdwg.mxu0
        %v331 = vadd.f32 %v304, %v329
        %332 = vst [vmem:[#allocation2] sm:$0xff] %v331
        // Predicated region
        $region53: #{tpu_custom_call.1} parent=39 // pred_check
          %p333 = pneg %p291
        $region54: #{tpu_custom_call.1} parent=39 // pred_check_branch
          %335 = sbr.rel (%p333) target = $region56
        $region55: #{tpu_custom_call.1} parent=39 // pred_region
          %v336 = vld [vmem:[#allocation2] sm:$0xff]
          %v337 = vld [vmem:[%s290] sm:$0xff]
          %339 = vset.pattern.permute.xlu0 0
          %340 = vperm.xlu0 %339, %v337
          %v341 = vpop.permute.xlu0 %340
          %v343 = vmul.f32 %v336, %v341
          %344 = vst [vmem:[#allocation2] sm:$0xff] %v343
          %v345 = vld [vmem:[#allocation2] sm:$0xff]
          %v346 = vld [vmem:[#allocation2 + $0x8] sm:$0xff]
          %v347 = vld [vmem:[#allocation6] sm:$0xff]
          %v348 = vld [vmem:[#allocation6 + $0x8] sm:$0xff]
          %v349 = vld [vmem:[#allocation6 + $0x10] sm:$0xff]
          %v350 = vld [vmem:[#allocation6 + $0x18] sm:$0xff]
          %v351 = vld [vmem:[#allocation6 + $0x20] sm:$0xff]
          %v352 = vld [vmem:[#allocation6 + $0x28] sm:$0xff]
          %v353 = vld [vmem:[#allocation6 + $0x30] sm:$0xff]
          %v354 = vld [vmem:[#allocation6 + $0x38] sm:$0xff]
          %v355 = vld [vmem:[#allocation6 + $0x40] sm:$0xff]
          %v356 = vld [vmem:[#allocation6 + $0x48] sm:$0xff]
          %v357 = vld [vmem:[#allocation6 + $0x50] sm:$0xff]
          %v358 = vld [vmem:[#allocation6 + $0x58] sm:$0xff]
          %v359 = vld [vmem:[#allocation6 + $0x60] sm:$0xff]
          %v360 = vld [vmem:[#allocation6 + $0x68] sm:$0xff]
          %v361 = vld [vmem:[#allocation6 + $0x70] sm:$0xff]
          %v362 = vld [vmem:[#allocation6 + $0x78] sm:$0xff]
          %v363 = vld [vmem:[#allocation6 + $0x80] sm:$0xff]
          %v364 = vld [vmem:[#allocation6 + $0x88] sm:$0xff]
          %v365 = vld [vmem:[#allocation6 + $0x90] sm:$0xff]
          %v366 = vld [vmem:[#allocation6 + $0x98] sm:$0xff]
          %v367 = vld [vmem:[#allocation6 + $0xa0] sm:$0xff]
          %v368 = vld [vmem:[#allocation6 + $0xa8] sm:$0xff]
          %v369 = vld [vmem:[#allocation6 + $0xb0] sm:$0xff]
          %v370 = vld [vmem:[#allocation6 + $0xb8] sm:$0xff]
          %v371 = vld [vmem:[#allocation6 + $0xc0] sm:$0xff]
          %v372 = vld [vmem:[#allocation6 + $0xc8] sm:$0xff]
          %v373 = vld [vmem:[#allocation6 + $0xd0] sm:$0xff]
          %v374 = vld [vmem:[#allocation6 + $0xd8] sm:$0xff]
          %v375 = vld [vmem:[#allocation6 + $0xe0] sm:$0xff]
          %v376 = vld [vmem:[#allocation6 + $0xe8] sm:$0xff]
          %v377 = vld [vmem:[#allocation6 + $0xf0] sm:$0xff]
          %v378 = vld [vmem:[#allocation6 + $0xf8] sm:$0xff]
          %v379 = vld [vmem:[%s4] sm:$0x1]
          %v381 = vperm.slane %v379, 0
          %383 = vmatpush.msra.mxu0 %v362
          %384 = vmatpush.msra.mxu0 %v361
          %385 = vmatpush.msra.mxu0 %v360
          %386 = vmatpush.msra.mxu0 %v359
          %387 = vmatpush.msra.mxu0 %v358
          %388 = vmatpush.msra.mxu0 %v357
          %389 = vmatpush.msra.mxu0 %v356
          %390 = vmatpush.msra.mxu0 %v355
          %391 = vmatpush.msra.mxu0 %v354
          %392 = vmatpush.msra.mxu0 %v353
          %393 = vmatpush.msra.mxu0 %v352
          %394 = vmatpush.msra.mxu0 %v351
          %395 = vmatpush.msra.mxu0 %v350
          %396 = vmatpush.msra.mxu0 %v349
          %397 = vmatpush.msra.mxu0 %v348
          %398 = vmatpush.msra.mxu0 %v347
          %399 = vmatmul.f32.gmra.mxu0 %v345
          %v400 = vpop.f32.mrf.mxu0
          %v401 = vadd.f32 %v381, %v400
          %402 = vdwg.mxu0
          %403 = vmatpush.msra.mxu0 %v378
          %404 = vmatpush.msra.mxu0 %v377
          %405 = vmatpush.msra.mxu0 %v376
          %406 = vmatpush.msra.mxu0 %v375
          %407 = vmatpush.msra.mxu0 %v374
          %408 = vmatpush.msra.mxu0 %v373
          %409 = vmatpush.msra.mxu0 %v372
          %410 = vmatpush.msra.mxu0 %v371
          %411 = vmatpush.msra.mxu0 %v370
          %412 = vmatpush.msra.mxu0 %v369
          %413 = vmatpush.msra.mxu0 %v368
          %414 = vmatpush.msra.mxu0 %v367
          %415 = vmatpush.msra.mxu0 %v366
          %416 = vmatpush.msra.mxu0 %v365
          %417 = vmatpush.msra.mxu0 %v364
          %418 = vmatpush.msra.mxu0 %v363
          %419 = vmatmul.f32.gmra.mxu0 %v346
          %v420 = vpop.f32.mrf.mxu0
          %v421 = vadd.f32 %v401, %v420
          %422 = vdwg.mxu0
          %v423 = vmax.f32 %v421, 0.0
          %424 = vst [vmem:[%s286] sm:$0xff] %v423
        $region56: #{tpu_custom_call.1} parent=39 // pred_fallthru
          _
        %s425 = sand.u32 %s160, 1
        %s426 = scalar_lea.sflag [#allocation5], %s425
        %s427 = sand.u32 %s160, 1
        %s428 = smul.addr %s427, 8
        %s429 = scalar_lea.vmem [#allocation8], %s428
        // Predicated region
        $region57: #{tpu_custom_call.1} parent=39 // pred_check
          %p430 = pneg %p170
        $region58: #{tpu_custom_call.1} parent=39 // pred_check_branch
          %432 = sbr.rel (%p430) target = $region60
        $region59: #{tpu_custom_call.1} parent=39 // pred_region
          %434 = vsyncadd %s426, 0
          %s435 = smul.addr %s27, 8
          %s436 = scalar_lea.hbm %s5, %s435
          %s438 = sshll.u32 %s429, 4
          %s439 = int_to_ptr.vmem [resolvable:$true] %s438
          %s440 = sshll.u32 %s436, 4
          %s441 = int_to_ptr.hbm [resolvable:$true] %s440
          %443 = dma.vmem_to_hbm [thread:$0]  %s439, 128, %s441, %s426
        $region60: #{tpu_custom_call.1} parent=39 // pred_fallthru
          _
      $region40: #{tpu_custom_call.1} parent=5 // pred_fallthru
        _
      %p444 = scmp.le.s32.totalorder 2, %s18
      // Predicated region
      $region61: #{tpu_custom_call.1} parent=5 // pred_check
        %p445 = pneg %p444
      $region62: #{tpu_custom_call.1} parent=5 // pred_check_branch
        %447 = sbr.rel (%p445) target = $region64
      $region63: #{tpu_custom_call.1} parent=5 // pred_region
        %s448 = ssub.s32 %s18, 2
        // Predicated region
        $region65: #{tpu_custom_call.1} parent=63 // pred_check
          %p449 = pneg %p176
        $region66: #{tpu_custom_call.1} parent=63 // pred_check_branch
          %451 = sbr.rel (%p449) target = $region68
        $region67: #{tpu_custom_call.1} parent=63 // pred_region
          %s452 = sand.u32 %s161, 1
          %s453 = scalar_lea.sflag [#allocation5], %s452
          %s454 = sand.u32 %s161, 1
          %s455 = smul.addr %s454, 8
          %s456 = scalar_lea.vmem [#allocation8], %s455
          %458 = dma.done %s453, 128
        $region68: #{tpu_custom_call.1} parent=63 // pred_fallthru
          _
      $region64: #{tpu_custom_call.1} parent=5 // pred_fallthru
        _
    $region6: #{tpu_custom_call.1} parent=1 // loop_footer
      %s22 = sadd.s32 1, %s18
    $region7: #{tpu_custom_call.1} parent=1 // loop_footer_branch
      %17 = sbr.rel target = $region3
    $region8: #{tpu_custom_call.1} parent=1 // loop_exit
      _
    %459 = vsyncpa [#allocation4], 1
    %s460 = scalar_lea.sflag [#allocation4], 1
    %461 = vsyncpa %s460, 1
    %462 = vsyncpa [#allocation7], 1
    %463 = vsyncpa [#allocation5], 1
    %s464 = scalar_lea.sflag [#allocation5], 1
    %465 = vsyncpa %s464, 1

// kernel: tpu_custom_call.1
$region0: #{tpu_custom_call.1}
  #allocation0 [shape = 'u32[]', space=smem, size = 0x4, offset = 0x4, fixed_abs, tag = 'smem constant byte address 0x4 - core index']
  #allocation1 [shape = 'u32[72,128]{1,0:T(1,128)}', space=vmem, size = 0x9000, scoped, tag = 'internal scratch']
  #allocation2 [shape = 'f32[8,256]{1,0:T(8,128)}', space=vmem, size = 0x2000, scoped, tag = 'scratch operand']
  %s0 = inlined_call_operand.hbm [shape: bf16[16,16], index: 0, kind: input, shape index: {}]
  %s1 = inlined_call_operand.vmem [shape: f32[16,1], index: 1, kind: input, shape index: {}]
  %s2 = inlined_call_operand.vmem [shape: f32[16,128], index: 2, kind: input, shape index: {}]
  %s3 = inlined_call_operand.hbm [shape: f32[256,128], index: 3, kind: input, shape index: {}]
  %s4 = inlined_call_operand.vmem [shape: f32[1,128], index: 4, kind: input, shape index: {}]
  %s5 = inlined_call_operand.hbm [shape: f32[16,128], index: 5, kind: output, shape index: {}]
  %s6 = sld [smem:[#allocation0]]
  $region69: #{tpu_custom_call.1} parent=0
    _
  %s8 = ssub.s32 1, %s6
  %s9 = scalar_select 0, %s8, %s6
  $region1: #{tpu_custom_call.1} parent=0
    #allocation3 [shape = 'u8[4096]{0}', space=vmem, size = 0x1000, scoped, tag = 'input window, operand 0']
    #allocation4 [shape = 's32[2]{0}', space=sflag, size = 0x8, scoped, tag = 'scoped memory for tpu_custom_call.1']
    #allocation5 [shape = 's32[2]{0}', space=sflag, size = 0x8, scoped, tag = 'scoped memory for tpu_custom_call.1']
    #allocation6 [shape = 'u8[131072]{0}', space=vmem, size = 0x20000, scoped, tag = 'input window, operand 3, single buffered']
    #allocation7 [shape = 's32[1]{0}', space=sflag, size = 0x4, scoped, tag = 'scoped memory for tpu_custom_call.1']
    #allocation8 [shape = 'u8[8192]{0}', space=vmem, size = 0x2000, scoped, tag = 'output window, operand 0']
    %10 = vsyncpa [#allocation4], 0
    %s11 = scalar_lea.sflag [#allocation4], 1
    %12 = vsyncpa %s11, 0
    %13 = vsyncpa [#allocation7], 0
    %14 = vsyncpa [#allocation5], 0
    %s15 = scalar_lea.sflag [#allocation5], 1
    %16 = vsyncpa %s15, 0
    loop: start=0, step=1, limit=4
    $region2: #{tpu_custom_call.1} parent=1 // loop_pre_header
      _
    $region3: #{tpu_custom_call.1} parent=1 // loop_header
      %s18 = sphi 0, %s22
      %p19 = scmp.ge.s32.totalorder %s18, 4
      %s25 = sphi 0, %s37
      %s26 = sphi 0, %s33
      %s27 = sphi 0, %s25
      %s28 = sphi 0, %s26
      %s29 = sphi 0, %s27
      %s30 = sphi 0, %s28
      %s42 = sphi 0, %s44
      %s45 = sphi 0, %s42
      %s46 = sphi 0, %s45
      %s62 = sphi 0, %s46
      %s68 = sphi 0, %s70
      %s71 = sphi 0, %s68
      %s72 = sphi 0, %s71
      %s88 = sphi 0, %s72
      %s92 = sphi 0, %s92
      %s94 = sphi 0, %s92
      %s95 = sphi 0, %s94
      %s109 = sphi 0, %s95
      %s113 = sphi 0, %s113
      %s115 = sphi 0, %s113
      %s116 = sphi 0, %s115
      %s130 = sphi 0, %s116
      %s134 = sphi 0, %s134
      %s136 = sphi 0, %s134
      %s137 = sphi 0, %s136
      %s151 = sphi 0, %s137
      %s157 = sphi 0, %s159
      %s160 = sphi 0, %s157
      %s161 = sphi 0, %s160
      %s177 = sphi 0, %s161
    $region4: #{tpu_custom_call.1} parent=1 // loop_header_branch
      %21 = sbr.rel (%p19) target = $region8
    $region5: #{tpu_custom_call.1} parent=1 // loop_body
      %s23 = ssub.s32 %s18, 1
      %s24 = ssub.s32 %s18, 2
      %s31 = sadd.s32 1, %s26
      %p32 = scmp.ge.s32.totalorder %s31, 1
      %s33 = scalar_select %p32, 0, %s31
      %s34 = sadd.s32 1, %s25
      %s35 = scalar_select %p32, %s34, %s25
      %p36 = scmp.ge.s32.totalorder %s35, 2
      %s37 = scalar_select %p36, 0, %s35
      %s38 = ssub.s32 %s25, %s37
      %s39 = ssub.s32 %s26, %s33
      %s40 = sor.u32 %s38, %s39
      %p41 = scmp.eq.s32.totalorder %s40, 0
      %s43 = sadd.s32 %s42, 1
      %s44 = scalar_select %p41, %s42, %s43
      %p47 = pneg %p41
      %p48 = scmp.eq.s32.totalorder %s18, 1
      %p49 = por %p47, %p48
      %p50 = scmp.ne.s32.totalorder %s42, %s45
      %p51 = scmp.eq.s32.totalorder %s18, 0
      %p52 = por %p50, %p51
      %p53 = scmp.ne.s32.totalorder %s42, %s45
      %p54 = scmp.eq.s32.totalorder %s23, 1
      %p55 = por %p53, %p54
      %p56 = scmp.ne.s32.totalorder %s45, %s46
      %p57 = scmp.eq.s32.totalorder %s23, 0
      %p58 = por %p56, %p57
      %p59 = scmp.ne.s32.totalorder %s45, %s46
      %p60 = scmp.eq.s32.totalorder %s24, 1
      %p61 = por %p59, %p60
      %p63 = scmp.ne.s32.totalorder %s46, %s62
      %p64 = scmp.eq.s32.totalorder %s24, 0
      %p65 = por %p63, %p64
      %s66 = ssub.s32 %s25, %s37
      %p67 = scmp.eq.s32.totalorder %s66, 0
      %s69 = sadd.s32 %s68, 1
      %s70 = scalar_select %p67, %s68, %s69
      %p73 = pneg %p67
      %p74 = scmp.eq.s32.totalorder %s18, 1
      %p75 = por %p73, %p74
      %p76 = scmp.ne.s32.totalorder %s68, %s71
      %p77 = scmp.eq.s32.totalorder %s18, 0
      %p78 = por %p76, %p77
      %p79 = scmp.ne.s32.totalorder %s68, %s71
      %p80 = scmp.eq.s32.totalorder %s23, 1
      %p81 = por %p79, %p80
      %p82 = scmp.ne.s32.totalorder %s71, %s72
      %p83 = scmp.eq.s32.totalorder %s23, 0
      %p84 = por %p82, %p83
      %p85 = scmp.ne.s32.totalorder %s71, %s72
      %p86 = scmp.eq.s32.totalorder %s24, 1
      %p87 = por %p85, %p86
      %p89 = scmp.ne.s32.totalorder %s72, %s88
      %p90 = scmp.eq.s32.totalorder %s24, 0
      %p91 = por %p89, %p90
      %s93 = sadd.s32 %s92, 1
      %p96 = scmp.eq.s32.totalorder %s18, 1
      %p97 = scmp.ne.s32.totalorder %s92, %s94
      %p98 = scmp.eq.s32.totalorder %s18, 0
      %p99 = por %p97, %p98
      %p100 = scmp.ne.s32.totalorder %s92, %s94
      %p101 = scmp.eq.s32.totalorder %s23, 1
      %p102 = por %p100, %p101
      %p103 = scmp.ne.s32.totalorder %s94, %s95
      %p104 = scmp.eq.s32.totalorder %s23, 0
      %p105 = por %p103, %p104
      %p106 = scmp.ne.s32.totalorder %s94, %s95
      %p107 = scmp.eq.s32.totalorder %s24, 1
      %p108 = por %p106, %p107
      %p110 = scmp.ne.s32.totalorder %s95, %s109
      %p111 = scmp.eq.s32.totalorder %s24, 0
      %p112 = por %p110, %p111
      %s114 = sadd.s32 %s113, 1
      %p117 = scmp.eq.s32.totalorder %s18, 1
      %p118 = scmp.ne.s32.totalorder %s113, %s115
      %p119 = scmp.eq.s32.totalorder %s18, 0
      %p120 = por %p118, %p119
      %p121 = scmp.ne.s32.totalorder %s113, %s115
      %p122 = scmp.eq.s32.totalorder %s23, 1
      %p123 = por %p121, %p122
      %p124 = scmp.ne.s32.totalorder %s115, %s116
      %p125 = scmp.eq.s32.totalorder %s23, 0
      %p126 = por %p124, %p125
      %p127 = scmp.ne.s32.totalorder %s115, %s116
      %p128 = scmp.eq.s32.totalorder %s24, 1
      %p129 = por %p127, %p128
      %p131 = scmp.ne.s32.totalorder %s116, %s130
      %p132 = scmp.eq.s32.totalorder %s24, 0
      %p133 = por %p131, %p132
      %s135 = sadd.s32 %s134, 1
      %p138 = scmp.eq.s32.totalorder %s18, 1
      %p139 = scmp.ne.s32.totalorder %s134, %s136
      %p140 = scmp.eq.s32.totalorder %s18, 0
      %p141 = por %p139, %p140
      %p142 = scmp.ne.s32.totalorder %s134, %s136
      %p143 = scmp.eq.s32.totalorder %s23, 1
      %p144 = por %p142, %p143
      %p145 = scmp.ne.s32.totalorder %s136, %s137
      %p146 = scmp.eq.s32.totalorder %s23, 0
      %p147 = por %p145, %p146
      %p148 = scmp.ne.s32.totalorder %s136, %s137
      %p149 = scmp.eq.s32.totalorder %s24, 1
      %p150 = por %p148, %p149
      %p152 = scmp.ne.s32.totalorder %s137, %s151
      %p153 = scmp.eq.s32.totalorder %s24, 0
      %p154 = por %p152, %p153
      %s155 = ssub.s32 %s25, %s37
      %p156 = scmp.eq.s32.totalorder %s155, 0
      %s158 = sadd.s32 %s157, 1
      %s159 = scalar_select %p156, %s157, %s158
      %p162 = pneg %p156
      %p163 = scmp.eq.s32.totalorder %s18, 1
      %p164 = por %p162, %p163
      %p165 = scmp.ne.s32.totalorder %s157, %s160
      %p166 = scmp.eq.s32.totalorder %s18, 0
      %p167 = por %p165, %p166
      %p168 = scmp.ne.s32.totalorder %s157, %s160
      %p169 = scmp.eq.s32.totalorder %s23, 1
      %p170 = por %p168, %p169
      %p171 = scmp.ne.s32.totalorder %s160, %s161
      %p172 = scmp.eq.s32.totalorder %s23, 0
      %p173 = por %p171, %p172
      %p174 = scmp.ne.s32.totalorder %s160, %s161
      %p175 = scmp.eq.s32.totalorder %s24, 1
      %p176 = por %p174, %p175
      %p178 = scmp.ne.s32.totalorder %s161, %s177
      %p179 = scmp.eq.s32.totalorder %s24, 0
      %p180 = por %p178, %p179
      %p181 = scmp.le.s32.totalorder 1, %s18
      %p182 = scmp.lt.s32.totalorder %s18, 3
      %p183 = pnand %p181, %p182
      %p184 = pneg %p183
      // Predicated region
      $region9: #{tpu_custom_call.1} parent=5 // pred_check
        _
      $region10: #{tpu_custom_call.1} parent=5 // pred_check_branch
        %186 = sbr.rel (%p183) target = $region12
      $region11: #{tpu_custom_call.1} parent=5 // pred_region
        %s187 = ssub.s32 %s18, 1
        // Predicated region
        $region13: #{tpu_custom_call.1} parent=11 // pred_check
          %p188 = pneg %p105
        $region14: #{tpu_custom_call.1} parent=11 // pred_check_branch
          %190 = sbr.rel (%p188) target = $region16
        $region15: #{tpu_custom_call.1} parent=11 // pred_region
          _
        $region16: #{tpu_custom_call.1} parent=11 // pred_fallthru
          _
        // Predicated region
        $region17: #{tpu_custom_call.1} parent=11 // pred_check
          %p191 = pneg %p126
        $region18: #{tpu_custom_call.1} parent=11 // pred_check_branch
          %193 = sbr.rel (%p191) target = $region20
        $region19: #{tpu_custom_call.1} parent=11 // pred_region
          %195 = vsyncadd [#allocation7], 0
          %s196 = sshll.u32 %s3, 4
          %s197 = int_to_ptr.hbm [resolvable:$true] %s196
          %s198 = sshll.u32 [#allocation6], 4
          %s199 = int_to_ptr.vmem [resolvable:$true] %s198
          %204 = dma.hbm_to_vmem [thread:$0]  %s197, 4096, %s199, [#allocation7], 128, 128, 8
        $region20: #{tpu_custom_call.1} parent=11 // pred_fallthru
          _
        // Predicated region
        $region21: #{tpu_custom_call.1} parent=11 // pred_check
          %p205 = pneg %p147
        $region22: #{tpu_custom_call.1} parent=11 // pred_check_branch
          %207 = sbr.rel (%p205) target = $region24
        $region23: #{tpu_custom_call.1} parent=11 // pred_region
          _
        $region24: #{tpu_custom_call.1} parent=11 // pred_fallthru
          _
      $region12: #{tpu_custom_call.1} parent=5 // pred_fallthru
        _
      %p208 = scmp.lt.s32.totalorder %s18, 2
      // Predicated region
      $region25: #{tpu_custom_call.1} parent=5 // pred_check
        %p209 = pneg %p208
      $region26: #{tpu_custom_call.1} parent=5 // pred_check_branch
        %211 = sbr.rel (%p209) target = $region28
      $region27: #{tpu_custom_call.1} parent=5 // pred_region
        // Predicated region
        $region29: #{tpu_custom_call.1} parent=27 // pred_check
          %p212 = pneg %p52
        $region30: #{tpu_custom_call.1} parent=27 // pred_check_branch
          %214 = sbr.rel (%p212) target = $region32
        $region31: #{tpu_custom_call.1} parent=27 // pred_region
          %s215 = sand.u32 %s42, 1
          %s216 = scalar_lea.sflag [#allocation4], %s215
          %s217 = sand.u32 %s42, 1
          %s218 = smul.addr %s217, 4
          %s219 = scalar_lea.vmem [#allocation3], %s218
          %221 = vsyncadd %s216, 0
          %s222 = sadd.s32 %s26, %s25
          %s223 = smul.addr %s222, 4
          %s224 = scalar_lea.hbm %s0, %s223
          %s226 = sshll.u32 %s224, 4
          %s227 = int_to_ptr.hbm [resolvable:$true] %s226
          %s228 = sshll.u32 %s219, 4
          %s229 = int_to_ptr.vmem [resolvable:$true] %s228
          %231 = dma.hbm_to_vmem [thread:$0]  %s227, 64, %s229, %s216
        $region32: #{tpu_custom_call.1} parent=27 // pred_fallthru
          _
        // Predicated region
        $region33: #{tpu_custom_call.1} parent=27 // pred_check
          %p232 = pneg %p78
        $region34: #{tpu_custom_call.1} parent=27 // pred_check_branch
          %234 = sbr.rel (%p232) target = $region36
        $region35: #{tpu_custom_call.1} parent=27 // pred_region
          %p235 = scmp.lt.s32.totalorder %s25, 1
          %s236 = scalar_select %p235, %s25, 1
          %s237 = smul.addr %s236, 8
          %s238 = scalar_lea.vmem %s1, %s237
        $region36: #{tpu_custom_call.1} parent=27 // pred_fallthru
          _
      $region28: #{tpu_custom_call.1} parent=5 // pred_fallthru
        _
      %p239 = scmp.le.s32.totalorder 1, %s18
      %p240 = scmp.lt.s32.totalorder %s18, 3
      %p241 = pnand %p239, %p240
      %p242 = pneg %p241
      // Predicated region
      $region37: #{tpu_custom_call.1} parent=5 // pred_check
        _
      $region38: #{tpu_custom_call.1} parent=5 // pred_check_branch
        %244 = sbr.rel (%p241) target = $region40
      $region39: #{tpu_custom_call.1} parent=5 // pred_region
        %s245 = ssub.s32 %s18, 1
        %s246 = sand.u32 %s45, 1
        %s247 = scalar_lea.sflag [#allocation4], %s246
        %s248 = sand.u32 %s45, 1
        %s249 = smul.addr %s248, 4
        %s250 = scalar_lea.vmem [#allocation3], %s249
        // Predicated region
        $region41: #{tpu_custom_call.1} parent=39 // pred_check
          %p251 = pneg %p58
        $region42: #{tpu_custom_call.1} parent=39 // pred_check_branch
          %253 = sbr.rel (%p251) target = $region44
        $region43: #{tpu_custom_call.1} parent=39 // pred_region
          %255 = dma.done %s247, 64
        $region44: #{tpu_custom_call.1} parent=39 // pred_fallthru
          _
        // Predicated region
        $region45: #{tpu_custom_call.1} parent=39 // pred_check
          %p256 = pneg %p126
        $region46: #{tpu_custom_call.1} parent=39 // pred_check_branch
          %258 = sbr.rel (%p256) target = $region48
        $region47: #{tpu_custom_call.1} parent=39 // pred_region
          %260 = dma.done [#allocation7], 4096
        $region48: #{tpu_custom_call.1} parent=39 // pred_fallthru
          _
        %s261 = sand.u32 %s45, 1
        %s262 = scalar_lea.sflag [#allocation4], %s261
        %s263 = sand.u32 %s45, 1
        %s264 = smul.addr %s263, 4
        %s265 = scalar_lea.vmem [#allocation3], %s264
        %p266 = pneg %p58
        %p267 = pneg %p55
        %p268 = scmp.lt.s32.totalorder %s27, 1
        %s269 = scalar_select %p268, %s27, 1
        %s270 = smul.addr %s269, 8
        %s271 = scalar_lea.vmem %s1, %s270
        %p272 = pneg %p84
        %p273 = pneg %p81
        %p274 = pneg %p105
        %p275 = pneg %p102
        %p276 = pneg %p126
        %p277 = pneg %p123
        %p278 = pneg %p147
        %p279 = pneg %p144
        %p280 = pneg %p173
        %p281 = pneg %p170
        %s282 = sand.u32 %s160, 1
        %s283 = scalar_lea.sflag [#allocation5], %s282
        %s284 = sand.u32 %s160, 1
        %s285 = smul.addr %s284, 8
        %s286 = scalar_lea.vmem [#allocation8], %s285
        %p287 = scmp.lt.s32.totalorder %s27, 1
        %s288 = scalar_select %p287, %s27, 1
        %s289 = smul.addr %s288, 8
        %s290 = scalar_lea.vmem %s1, %s289
        %p291 = scmp.eq.s32.totalorder %s28, 0
        // Predicated region
        $region49: #{tpu_custom_call.1} parent=39 // pred_check
          %p292 = pneg %p291
        $region50: #{tpu_custom_call.1} parent=39 // pred_check_branch
          %294 = sbr.rel (%p292) target = $region52
        $region51: #{tpu_custom_call.1} parent=39 // pred_region
          %295 = vst [vmem:[#allocation2] sm:$0xff] 0.0
          %s296 = smul.u32 %s27, 8
          %s297 = scalar_lea.vmem %s2, %s296
          %v298 = vld [vmem:[%s297] sm:$0xff]
          %299 = vst [vmem:[#allocation2 + $0x8] sm:$0xff] %v298
        $region52: #{tpu_custom_call.1} parent=39 // pred_fallthru
          _
        %s300 = smul.u32 %s28, 16
        %s301 = scalar_lea.vmem %s2, %s300
        %v302 = vld [vmem:[%s301] sm:$0xff]
        %v303 = vld [vmem:[%s301 + $0x8] sm:$0xff]
        %v304 = vld [vmem:[#allocation2] sm:$0xff]
        %v305 = vld [vmem:[%s250] sm:$0xf]
        %v306 = vunpack.c.l.bf16 %v305
        %vm307 = vcmask 130048
        %v309 = vsel %vm307, %v306, 0
        %311 = vmatpush.msra.mxu0 0.0
        %312 = vmatpush.msra.mxu0 0.0
        %313 = vmatpush.msra.mxu0 0.0
        %314 = vmatpush.msra.mxu0 0.0
        %315 = vmatpush.msra.mxu0 0.0
        %316 = vmatpush.msra.mxu0 0.0
        %317 = vmatpush.msra.mxu0 0.0
        %318 = vmatpush.msra.mxu0 0.0
        %319 = vmatpush.msra.mxu0 0.0
        %320 = vmatpush.msra.mxu0 0.0
        %321 = vmatpush.msra.mxu0 0.0
        %322 = vmatpush.msra.mxu0 0.0
        %323 = vmatpush.msra.mxu0 0.0
        %324 = vmatpush.msra.mxu0 0.0
        %325 = vmatpush.msra.mxu0 %v303
        %326 = vmatpush.msra.mxu0 %v302
        %327 = vmatmul.f32.gmra.mxu0 %v309
        %v328 = vpop.f32.mrf.mxu0
        %v329 = vadd.f32 0.0, %v328
        %330 = vdwg.mxu0
        %v331 = vadd.f32 %v304, %v329
        %332 = vst [vmem:[#allocation2] sm:$0xff] %v331
        // Predicated region
        $region53: #{tpu_custom_call.1} parent=39 // pred_check
          %p333 = pneg %p291
        $region54: #{tpu_custom_call.1} parent=39 // pred_check_branch
          %335 = sbr.rel (%p333) target = $region56
        $region55: #{tpu_custom_call.1} parent=39 // pred_region
          %v336 = vld [vmem:[#allocation2] sm:$0xff]
          %v337 = vld [vmem:[%s290] sm:$0xff]
          %339 = vset.pattern.permute.xlu0 0
          %340 = vperm.xlu0 %339, %v337
          %v341 = vpop.permute.xlu0 %340
          %v343 = vmul.f32 %v336, %v341
          %344 = vst [vmem:[#allocation2] sm:$0xff] %v343
          %v345 = vld [vmem:[#allocation2] sm:$0xff]
          %v346 = vld [vmem:[#allocation2 + $0x8] sm:$0xff]
          %v347 = vld [vmem:[#allocation6] sm:$0xff]
          %v348 = vld [vmem:[#allocation6 + $0x8] sm:$0xff]
          %v349 = vld [vmem:[#allocation6 + $0x10] sm:$0xff]
          %v350 = vld [vmem:[#allocation6 + $0x18] sm:$0xff]
          %v351 = vld [vmem:[#allocation6 + $0x20] sm:$0xff]
          %v352 = vld [vmem:[#allocation6 + $0x28] sm:$0xff]
          %v353 = vld [vmem:[#allocation6 + $0x30] sm:$0xff]
          %v354 = vld [vmem:[#allocation6 + $0x38] sm:$0xff]
          %v355 = vld [vmem:[#allocation6 + $0x40] sm:$0xff]
          %v356 = vld [vmem:[#allocation6 + $0x48] sm:$0xff]
          %v357 = vld [vmem:[#allocation6 + $0x50] sm:$0xff]
          %v358 = vld [vmem:[#allocation6 + $0x58] sm:$0xff]
          %v359 = vld [vmem:[#allocation6 + $0x60] sm:$0xff]
          %v360 = vld [vmem:[#allocation6 + $0x68] sm:$0xff]
          %v361 = vld [vmem:[#allocation6 + $0x70] sm:$0xff]
          %v362 = vld [vmem:[#allocation6 + $0x78] sm:$0xff]
          %v363 = vld [vmem:[#allocation6 + $0x80] sm:$0xff]
          %v364 = vld [vmem:[#allocation6 + $0x88] sm:$0xff]
          %v365 = vld [vmem:[#allocation6 + $0x90] sm:$0xff]
          %v366 = vld [vmem:[#allocation6 + $0x98] sm:$0xff]
          %v367 = vld [vmem:[#allocation6 + $0xa0] sm:$0xff]
          %v368 = vld [vmem:[#allocation6 + $0xa8] sm:$0xff]
          %v369 = vld [vmem:[#allocation6 + $0xb0] sm:$0xff]
          %v370 = vld [vmem:[#allocation6 + $0xb8] sm:$0xff]
          %v371 = vld [vmem:[#allocation6 + $0xc0] sm:$0xff]
          %v372 = vld [vmem:[#allocation6 + $0xc8] sm:$0xff]
          %v373 = vld [vmem:[#allocation6 + $0xd0] sm:$0xff]
          %v374 = vld [vmem:[#allocation6 + $0xd8] sm:$0xff]
          %v375 = vld [vmem:[#allocation6 + $0xe0] sm:$0xff]
          %v376 = vld [vmem:[#allocation6 + $0xe8] sm:$0xff]
          %v377 = vld [vmem:[#allocation6 + $0xf0] sm:$0xff]
          %v378 = vld [vmem:[#allocation6 + $0xf8] sm:$0xff]
          %v379 = vld [vmem:[%s4] sm:$0x1]
          %v381 = vperm.slane %v379, 0
          %383 = vmatpush.msra.mxu0 %v362
          %384 = vmatpush.msra.mxu0 %v361
          %385 = vmatpush.msra.mxu0 %v360
          %386 = vmatpush.msra.mxu0 %v359
          %387 = vmatpush.msra.mxu0 %v358
          %388 = vmatpush.msra.mxu0 %v357
          %389 = vmatpush.msra.mxu0 %v356
          %390 = vmatpush.msra.mxu0 %v355
          %391 = vmatpush.msra.mxu0 %v354
          %392 = vmatpush.msra.mxu0 %v353
          %393 = vmatpush.msra.mxu0 %v352
          %394 = vmatpush.msra.mxu0 %v351
          %395 = vmatpush.msra.mxu0 %v350
          %396 = vmatpush.msra.mxu0 %v349
          %397 = vmatpush.msra.mxu0 %v348
          %398 = vmatpush.msra.mxu0 %v347
          %399 = vmatmul.f32.gmra.mxu0 %v345
          %v400 = vpop.f32.mrf.mxu0
          %v401 = vadd.f32 %v381, %v400
          %402 = vdwg.mxu0
          %403 = vmatpush.msra.mxu0 %v378
          %404 = vmatpush.msra.mxu0 %v377
          %405 = vmatpush.msra.mxu0 %v376
          %406 = vmatpush.msra.mxu0 %v375
          %407 = vmatpush.msra.mxu0 %v374
          %408 = vmatpush.msra.mxu0 %v373
          %409 = vmatpush.msra.mxu0 %v372
          %410 = vmatpush.msra.mxu0 %v371
          %411 = vmatpush.msra.mxu0 %v370
          %412 = vmatpush.msra.mxu0 %v369
          %413 = vmatpush.msra.mxu0 %v368
          %414 = vmatpush.msra.mxu0 %v367
          %415 = vmatpush.msra.mxu0 %v366
          %416 = vmatpush.msra.mxu0 %v365
          %417 = vmatpush.msra.mxu0 %v364
          %418 = vmatpush.msra.mxu0 %v363
          %419 = vmatmul.f32.gmra.mxu0 %v346
          %v420 = vpop.f32.mrf.mxu0
          %v421 = vadd.f32 %v401, %v420
          %422 = vdwg.mxu0
          %v423 = vmax.f32 %v421, 0.0
          %424 = vst [vmem:[%s286] sm:$0xff] %v423
        $region56: #{tpu_custom_call.1} parent=39 // pred_fallthru
          _
        %s425 = sand.u32 %s160, 1
        %s426 = scalar_lea.sflag [#allocation5], %s425
        %s427 = sand.u32 %s160, 1
        %s428 = smul.addr %s427, 8
        %s429 = scalar_lea.vmem [#allocation8], %s428
        // Predicated region
        $region57: #{tpu_custom_call.1} parent=39 // pred_check
          %p430 = pneg %p170
        $region58: #{tpu_custom_call.1} parent=39 // pred_check_branch
          %432 = sbr.rel (%p430) target = $region60
        $region59: #{tpu_custom_call.1} parent=39 // pred_region
          %434 = vsyncadd %s426, 0
          %s435 = smul.addr %s27, 8
          %s436 = scalar_lea.hbm %s5, %s435
          %s438 = sshll.u32 %s429, 4
          %s439 = int_to_ptr.vmem [resolvable:$true] %s438
          %s440 = sshll.u32 %s436, 4
          %s441 = int_to_ptr.hbm [resolvable:$true] %s440
          %443 = dma.vmem_to_hbm [thread:$0]  %s439, 128, %s441, %s426
        $region60: #{tpu_custom_call.1} parent=39 // pred_fallthru
          _
      $region40: #{tpu_custom_call.1} parent=5 // pred_fallthru
        _
      %p444 = scmp.le.s32.totalorder 2, %s18
      // Predicated region
      $region61: #{tpu_custom_call.1} parent=5 // pred_check
        %p445 = pneg %p444
      $region62: #{tpu_custom_call.1} parent=5 // pred_check_branch
        %447 = sbr.rel (%p445) target = $region64
      $region63: #{tpu_custom_call.1} parent=5 // pred_region
        %s448 = ssub.s32 %s18, 2
        // Predicated region
        $region65: #{tpu_custom_call.1} parent=63 // pred_check
          %p449 = pneg %p176
        $region66: #{tpu_custom_call.1} parent=63 // pred_check_branch
          %451 = sbr.rel (%p449) target = $region68
        $region67: #{tpu_custom_call.1} parent=63 // pred_region
          %s452 = sand.u32 %s161, 1
          %s453 = scalar_lea.sflag [#allocation5], %s452
          %s454 = sand.u32 %s161, 1
          %s455 = smul.addr %s454, 8
          %s456 = scalar_lea.vmem [#allocation8], %s455
          %458 = dma.done %s453, 128
        $region68: #{tpu_custom_call.1} parent=63 // pred_fallthru
          _
      $region64: #{tpu_custom_call.1} parent=5 // pred_fallthru
        _
    $region6: #{tpu_custom_call.1} parent=1 // loop_footer
      %s22 = sadd.s32 1, %s18
    $region7: #{tpu_custom_call.1} parent=1 // loop_footer_branch
      %17 = sbr.rel target = $region3
    $region8: #{tpu_custom_call.1} parent=1 // loop_exit
      _
    %459 = vsyncpa [#allocation4], 1
    %s460 = scalar_lea.sflag [#allocation4], 1
    %461 = vsyncpa %s460, 1
    %462 = vsyncpa [#allocation7], 1
    %463 = vsyncpa [#allocation5], 1
    %s464 = scalar_lea.sflag [#allocation5], 1
    %465 = vsyncpa %s464, 1

</llo_original>
